<compile_context>
chip_gen: v5e
topology: v5e:2x2
jax: 0.10.0
libtpu: 0.0.40
codegen_flags: <defaults>
</compile_context>

<pallas_src>
import math

import jax
import jax.numpy as jnp
from jax.experimental import pallas as pl
from jax.experimental.pallas import tpu as pltpu

EPS = 1e-5          # nn.BatchNorm1d default eps
LANE = 128
SUBLANE = 8
MAX_BATCH_TILE = 256


def _round_up(x, m):
    return ((x + m - 1) // m) * m


def _pad_dim(d):
    # <=128 -> pad to 128 (don't over-pad tiny dims); >128 -> pad to 256-multiples
    # so K/N tiles fill the 256x256 MXU on v6e/v7x.
    return _round_up(d, LANE) if d <= LANE else _round_up(d, 2 * LANE)


# ---------------------------------------------------------------------------
# Fused kernel: the whole MLP in one program.
#   args: slopes(SMEM), x, W0, b0, W1, b1, ..., Wf, bf, out
#   (BN already folded into W/b; Dropout is identity in eval mode.)
#   Weights + activation stream are bf16; accumulation, bias add and PReLU are f32.
# ---------------------------------------------------------------------------
def _fused_mlp_kernel(slopes_ref, x_ref, *rest):
    *wb_refs, o_ref = rest
    n_layers = len(wb_refs) // 2

    h = x_ref[...]                                      # bf16 input tile
    for i in range(n_layers - 1):                       # hidden layers
        w = wb_refs[2 * i][...]                         # bf16 weight
        b = wb_refs[2 * i + 1][...]                     # f32 bias
        y = jnp.dot(h, w, preferred_element_type=jnp.float32) + b
        a = slopes_ref[0, i]                            # PReLU slope, scalar SMEM read
        hf = jnp.where(y >= 0.0, y, a * y)              # f32 epilogue (v5e: no bf16 VALU)
        # Dropout(p=0.2) is identity in eval mode.
        h = hf.astype(jnp.bfloat16)                     # downcast only at matmul input

    w = wb_refs[-2][...]
    b = wb_refs[-1][...]
    o_ref[...] = jnp.dot(h, w, preferred_element_type=jnp.float32) + b


# ---------------------------------------------------------------------------
# Parameter construction (deterministic, mirrors PyTorch default inits),
# with eval-mode BatchNorm folding, bf16 quantization and lane padding done
# once, at build time.
# ---------------------------------------------------------------------------
def init_linear_params(key, fan_in, fan_out):
    kw, kb = jax.random.split(key)
    bound = 1.0 / math.sqrt(fan_in)          # PyTorch nn.Linear default init bound
    w = jax.random.uniform(kw, (fan_in, fan_out), jnp.float32, -bound, bound)
    b = jax.random.uniform(kb, (fan_out,), jnp.float32, -bound, bound)
    return w, b


def build_simple_mlp_params(key, size_list):
    n_hidden = len(size_list) - 2
    keys = jax.random.split(key, n_hidden + 1)
    pad = tuple(_pad_dim(d) for d in size_list)

    weights, biases, slopes, raw = [], [], [], []

    for i in range(n_hidden):
        fi, fo = size_list[i], size_list[i + 1]
        w, b = init_linear_params(keys[i], fi, fo)
        # BatchNorm1d eval-mode parameters at their default init.
        gamma = jnp.ones((fo,), jnp.float32)
        beta = jnp.zeros((fo,), jnp.float32)
        rm = jnp.zeros((fo,), jnp.float32)
        rv = jnp.ones((fo,), jnp.float32)
        slope = jnp.float32(0.25)            # nn.PReLU() default (single shared slope)

        # Fold BN (eval) into the Linear.
        scale = gamma * jax.lax.rsqrt(rv + EPS)
        w_f = w * scale[None, :]
        b_f = (b - rm) * scale + beta

        weights.append(jnp.zeros((pad[i], pad[i + 1]), jnp.float32)
                       .at[:fi, :fo].set(w_f).astype(jnp.bfloat16))
        biases.append(jnp.zeros((1, pad[i + 1]), jnp.float32).at[0, :fo].set(b_f))
        slopes.append(slope)
        raw.append(dict(kind="hidden", w=w, b=b, gamma=gamma, beta=beta,
                        rm=rm, rv=rv, a=slope))

    fi, fo = size_list[-2], size_list[-1]
    w, b = init_linear_params(keys[-1], fi, fo)
    weights.append(jnp.zeros((pad[-2], pad[-1]), jnp.float32)
                   .at[:fi, :fo].set(w).astype(jnp.bfloat16))
    biases.append(jnp.zeros((1, pad[-1]), jnp.float32).at[0, :fo].set(b))
    raw.append(dict(kind="final", w=w, b=b))

    if n_hidden == 0:
        slopes_arr = jnp.zeros((1, 1), jnp.float32)
    else:
        slopes_arr = jnp.stack(slopes).reshape(1, n_hidden).astype(jnp.float32)

    return dict(weights=weights, biases=biases, slopes=slopes_arr,
                size_list=tuple(size_list), pad=pad, raw=raw)


# ---------------------------------------------------------------------------
# Forward: single fused pallas_call (grid over batch tiles).
# ---------------------------------------------------------------------------
def simple_mlp_forward(params, x):
    size_list, pad = params["size_list"], params["pad"]
    weights, biases, slopes = params["weights"], params["biases"], params["slopes"]

    n, fin = x.shape
    assert fin == size_list[0]
    in_pad, out_pad, f_out = pad[0], pad[-1], size_list[-1]

    # Batch tiling: multiple of 8 sublanes, capped at 256, and capped at n_pad//2 so
    # the "parallel" grid has >=2 steps (feeds both v7x TensorCores) once batch >= 16.
    n_pad8 = _round_up(n, SUBLANE)
    tile_n = min(MAX_BATCH_TILE,
                 max(SUBLANE, (n_pad8 // 2) // SUBLANE * SUBLANE))
    n_pad = _round_up(n_pad8, tile_n)

    row_pad, col_pad = n_pad - n, in_pad - fin
    x_p = x.astype(jnp.bfloat16)
    if row_pad or col_pad:
        x_p = jnp.pad(x_p, ((0, row_pad), (0, col_pad)))

    in_specs = [
        pl.BlockSpec(slopes.shape, lambda i: (0, 0),
                     memory_space=pltpu.MemorySpace.SMEM),      # PReLU slopes
        pl.BlockSpec((tile_n, in_pad), lambda i: (i, 0)),       # x tile (double-buffered)
    ]
    wb_args = []
    for w, b in zip(weights, biases):
        # Grid-invariant -> never re-DMA'd; single buffer halves VMEM residency.
        in_specs.append(pl.BlockSpec(w.shape, lambda i: (0, 0),
                                     pipeline_mode=pl.Buffered(1)))
        in_specs.append(pl.BlockSpec(b.shape, lambda i: (0, 0),
                                     pipeline_mode=pl.Buffered(1)))
        wb_args += [w, b]

    # Explicit VMEM budget (portability to v7x's 64 MiB VMEM).
    param_bytes = sum(w.size * w.dtype.itemsize + b.size * b.dtype.itemsize
                      for w, b in zip(weights, biases))              # single-buffered
    act_bytes = 2 * tile_n * in_pad * 2 + 2 * tile_n * out_pad * 4   # double-buffered I/O
    live_bytes = 2 * tile_n * max(pad) * 4                           # live h (f32 + bf16)
    vmem_limit = min(64 << 20,
                     max(8 << 20, 2 * (param_bytes + act_bytes + live_bytes)))

    out = pl.pallas_call(
        _fused_mlp_kernel,
        out_shape=jax.ShapeDtypeStruct((n_pad, out_pad), jnp.float32),
        grid=(n_pad // tile_n,),
        in_specs=in_specs,
        out_specs=pl.BlockSpec((tile_n, out_pad), lambda i: (i, 0)),
        compiler_params=pltpu.CompilerParams(
            dimension_semantics=("parallel",),
            vmem_limit_bytes=vmem_limit),
    )(slopes, x_p, *wb_args)

    # Slice back to the logical shape; skip the row slice when no rows were padded.
    # (Downstream consumers could also read the lane-padded (n_pad, out_pad) slab
    # directly to avoid this extra XLA op at large batch.)
    if out_pad != f_out:
        out = out[:, :f_out]
    if row_pad:
        out = out[:n]
    return out


# ---------------------------------------------------------------------------
# Pure-JAX eval-mode references.
#   reference_forward: exact f32 math (un-fused, un-folded) -> loose check.
#   bf16_reference_forward: mirrors the kernel's bf16 casts exactly -> tight check.
# ---------------------------------------------------------------------------
def reference_forward(params, x):
    h = x
    for layer in params["raw"]:
        if layer["kind"] == "hidden":
            y = h @ layer["w"] + layer["b"]
            y = (y - layer["rm"]) * jax.lax.rsqrt(layer["rv"] + EPS) * layer["gamma"] \
                + layer["beta"]
            h = jnp.where(y >= 0.0, y, layer["a"] * y)   # dropout = identity (eval)
        else:
            h = h @ layer["w"] + layer["b"]
    return h


def bf16_reference_forward(params, x):
    h = x.astype(jnp.float32)
    for layer in params["raw"]:
        if layer["kind"] == "hidden":
            scale = layer["gamma"] * jax.lax.rsqrt(layer["rv"] + EPS)
            w = (layer["w"] * scale[None, :]).astype(jnp.bfloat16)
            b = (layer["b"] - layer["rm"]) * scale + layer["beta"]
            y = jnp.dot(h.astype(jnp.bfloat16), w,
                        preferred_element_type=jnp.float32) + b
            h = jnp.where(y >= 0.0, y, layer["a"] * y)
        else:
            w = layer["w"].astype(jnp.bfloat16)
            h = jnp.dot(h.astype(jnp.bfloat16), w,
                        preferred_element_type=jnp.float32) + layer["b"]
    return h


# ---------------------------------------------------------------------------
if __name__ == "__main__":
    size_list = [32, 64, 64, 10]   # input dim 32, two hidden layers, 10 classes
    batch = 8

    key = jax.random.PRNGKey(0)
    k_params, k_x = jax.random.split(key)
    params = build_simple_mlp_params(k_params, size_list)
    x = jax.random.normal(k_x, (batch, size_list[0]), dtype=jnp.float32)

    out = simple_mlp_forward(params, x)
    jax.block_until_ready(out)

    assert out.shape == (batch, size_list[-1]), out.shape
    assert out.dtype == jnp.float32
    assert bool(jnp.isfinite(out).all())

    # Loose check vs. exact f32 semantics (only bf16 quantization error allowed).
    ref_f32 = reference_forward(params, x)
    assert bool(jnp.allclose(out, ref_f32, rtol=3e-2, atol=3e-2)), \
        float(jnp.max(jnp.abs(out - ref_f32)))

    # Tight check vs. a reference that mirrors the kernel's bf16 casts.
    ref_bf16 = bf16_reference_forward(params, x)
    assert bool(jnp.allclose(out, ref_bf16, rtol=1e-4, atol=1e-4)), \
        float(jnp.max(jnp.abs(out - ref_bf16)))

    print("KERNEL_OK")
</pallas_src>

<mosaic_0001>
module attributes {stable_mosaic.version = 11 : i64} {
  func.func @_fused_mlp_kernel(%arg0: i32, %arg1: memref<1x2xf32, #tpu.memory_space<smem>>, %arg2: memref<8x128xbf16, #tpu.memory_space<vmem>>, %arg3: memref<128x128xbf16, #tpu.memory_space<vmem>>, %arg4: memref<1x128xf32, #tpu.memory_space<vmem>>, %arg5: memref<128x128xbf16, #tpu.memory_space<vmem>>, %arg6: memref<1x128xf32, #tpu.memory_space<vmem>>, %arg7: memref<128x128xbf16, #tpu.memory_space<vmem>>, %arg8: memref<1x128xf32, #tpu.memory_space<vmem>>, %arg9: memref<8x128xf32, #tpu.memory_space<vmem>>) attributes {dimension_semantics = [#tpu.dimension_semantics<parallel>], iteration_bounds = array<i64: 1>, scalar_prefetch = 0 : i64, scratch_operands = 0 : i64, tpu.core_type = #tpu.core_type<tc>, window_params = [{transform_indices = @transform_0, window_bounds = array<i64: 1, 2>}, {transform_indices = @transform_1, window_bounds = array<i64: 8, 128>}, {pipeline_mode = #tpu.pipeline_mode<synchronous>, transform_indices = @transform_2, window_bounds = array<i64: 128, 128>}, {pipeline_mode = #tpu.pipeline_mode<synchronous>, transform_indices = @transform_3, window_bounds = array<i64: 1, 128>}, {pipeline_mode = #tpu.pipeline_mode<synchronous>, transform_indices = @transform_4, window_bounds = array<i64: 128, 128>}, {pipeline_mode = #tpu.pipeline_mode<synchronous>, transform_indices = @transform_5, window_bounds = array<i64: 1, 128>}, {pipeline_mode = #tpu.pipeline_mode<synchronous>, transform_indices = @transform_6, window_bounds = array<i64: 128, 128>}, {pipeline_mode = #tpu.pipeline_mode<synchronous>, transform_indices = @transform_7, window_bounds = array<i64: 1, 128>}, {transform_indices = @transform_8, window_bounds = array<i64: 8, 128>}]} {
    %c0 = arith.constant 0 : index
    %c0_0 = arith.constant 0 : index
    %0 = vector.load %arg2[%c0, %c0_0] : memref<8x128xbf16, #tpu.memory_space<vmem>>, vector<8x128xbf16>
    %c0_1 = arith.constant 0 : index
    %c0_2 = arith.constant 0 : index
    %1 = vector.load %arg3[%c0_1, %c0_2] : memref<128x128xbf16, #tpu.memory_space<vmem>>, vector<128x128xbf16>
    %c0_3 = arith.constant 0 : index
    %c0_4 = arith.constant 0 : index
    %2 = vector.load %arg4[%c0_3, %c0_4] : memref<1x128xf32, #tpu.memory_space<vmem>>, vector<1x128xf32>
    %cst = arith.constant dense<0.000000e+00> : vector<8x128xf32>
    %3 = tpu.matmul %0, %1, %cst {dimension_numbers = #tpu.dot_dimension_numbers<[1], [0], [0], [1], [0, 0, 1, 1], [], []>} : vector<8x128xbf16>, vector<128x128xbf16>, vector<8x128xf32> -> vector<8x128xf32>
    %4 = vector.broadcast %2 : vector<1x128xf32> to vector<8x128xf32>
    %5 = arith.addf %3, %4 : vector<8x128xf32>
    %c0_5 = arith.constant 0 : index
    %c0_6 = arith.constant 0 : index
    %6 = memref.load %arg1[%c0_5, %c0_6] : memref<1x2xf32, #tpu.memory_space<smem>>
    %cst_7 = arith.constant 0.000000e+00 : f32
    %7 = vector.broadcast %cst_7 : f32 to vector<8x128xf32>
    %8 = arith.cmpf oge, %5, %7 : vector<8x128xf32>
    %9 = vector.broadcast %6 : f32 to vector<8x128xf32>
    %10 = arith.mulf %9, %5 : vector<8x128xf32>
    %11 = arith.select %8, %5, %10 : vector<8x128xi1>, vector<8x128xf32>
    %12 = arith.truncf %11 : vector<8x128xf32> to vector<8x128xbf16>
    %c0_8 = arith.constant 0 : index
    %c0_9 = arith.constant 0 : index
    %13 = vector.load %arg5[%c0_8, %c0_9] : memref<128x128xbf16, #tpu.memory_space<vmem>>, vector<128x128xbf16>
    %c0_10 = arith.constant 0 : index
    %c0_11 = arith.constant 0 : index
    %14 = vector.load %arg6[%c0_10, %c0_11] : memref<1x128xf32, #tpu.memory_space<vmem>>, vector<1x128xf32>
    %cst_12 = arith.constant dense<0.000000e+00> : vector<8x128xf32>
    %15 = tpu.matmul %12, %13, %cst_12 {dimension_numbers = #tpu.dot_dimension_numbers<[1], [0], [0], [1], [0, 0, 1, 1], [], []>} : vector<8x128xbf16>, vector<128x128xbf16>, vector<8x128xf32> -> vector<8x128xf32>
    %16 = vector.broadcast %14 : vector<1x128xf32> to vector<8x128xf32>
    %17 = arith.addf %15, %16 : vector<8x128xf32>
    %c0_13 = arith.constant 0 : index
    %c1 = arith.constant 1 : index
    %18 = memref.load %arg1[%c0_13, %c1] : memref<1x2xf32, #tpu.memory_space<smem>>
    %cst_14 = arith.constant 0.000000e+00 : f32
    %19 = vector.broadcast %cst_14 : f32 to vector<8x128xf32>
    %20 = arith.cmpf oge, %17, %19 : vector<8x128xf32>
    %21 = vector.broadcast %18 : f32 to vector<8x128xf32>
    %22 = arith.mulf %21, %17 : vector<8x128xf32>
    %23 = arith.select %20, %17, %22 : vector<8x128xi1>, vector<8x128xf32>
    %24 = arith.truncf %23 : vector<8x128xf32> to vector<8x128xbf16>
    %c0_15 = arith.constant 0 : index
    %c0_16 = arith.constant 0 : index
    %25 = vector.load %arg7[%c0_15, %c0_16] : memref<128x128xbf16, #tpu.memory_space<vmem>>, vector<128x128xbf16>
    %c0_17 = arith.constant 0 : index
    %c0_18 = arith.constant 0 : index
    %26 = vector.load %arg8[%c0_17, %c0_18] : memref<1x128xf32, #tpu.memory_space<vmem>>, vector<1x128xf32>
    %cst_19 = arith.constant dense<0.000000e+00> : vector<8x128xf32>
    %27 = tpu.matmul %24, %25, %cst_19 {dimension_numbers = #tpu.dot_dimension_numbers<[1], [0], [0], [1], [0, 0, 1, 1], [], []>} : vector<8x128xbf16>, vector<128x128xbf16>, vector<8x128xf32> -> vector<8x128xf32>
    %28 = vector.broadcast %26 : vector<1x128xf32> to vector<8x128xf32>
    %29 = arith.addf %27, %28 : vector<8x128xf32>
    %c0_20 = arith.constant 0 : index
    %c0_21 = arith.constant 0 : index
    %30 = vector.load %arg9[%c0_20, %c0_21] : memref<8x128xf32, #tpu.memory_space<vmem>>, vector<8x128xf32>
    tpu.vector_store %arg9[%c0_20, %c0_21], %29 {strides = array<i32>} : memref<8x128xf32, #tpu.memory_space<vmem>>, vector<8x128xf32>,
    return
  }
  func.func @transform_0(%arg0: i32) -> (i32, i32) {
    %c0_i32 = arith.constant 0 : i32
    %c0_i32_0 = arith.constant 0 : i32
    %c0_i32_1 = arith.constant 0 : i32
    return %c0_i32, %c0_i32_0 : i32, i32
  }
  func.func @transform_1(%arg0: i32) -> (i32, i32) {
    %c0_i32 = arith.constant 0 : i32
    %c0_i32_0 = arith.constant 0 : i32
    return %arg0, %c0_i32 : i32, i32
  }
  func.func @transform_2(%arg0: i32) -> (i32, i32) {
    %c0_i32 = arith.constant 0 : i32
    %c0_i32_0 = arith.constant 0 : i32
    %c0_i32_1 = arith.constant 0 : i32
    return %c0_i32, %c0_i32_0 : i32, i32
  }
  func.func @transform_3(%arg0: i32) -> (i32, i32) {
    %c0_i32 = arith.constant 0 : i32
    %c0_i32_0 = arith.constant 0 : i32
    %c0_i32_1 = arith.constant 0 : i32
    return %c0_i32, %c0_i32_0 : i32, i32
  }
  func.func @transform_4(%arg0: i32) -> (i32, i32) {
    %c0_i32 = arith.constant 0 : i32
    %c0_i32_0 = arith.constant 0 : i32
    %c0_i32_1 = arith.constant 0 : i32
    return %c0_i32, %c0_i32_0 : i32, i32
  }
  func.func @transform_5(%arg0: i32) -> (i32, i32) {
    %c0_i32 = arith.constant 0 : i32
    %c0_i32_0 = arith.constant 0 : i32
    %c0_i32_1 = arith.constant 0 : i32
    return %c0_i32, %c0_i32_0 : i32, i32
  }
  func.func @transform_6(%arg0: i32) -> (i32, i32) {
    %c0_i32 = arith.constant 0 : i32
    %c0_i32_0 = arith.constant 0 : i32
    %c0_i32_1 = arith.constant 0 : i32
    return %c0_i32, %c0_i32_0 : i32, i32
  }
  func.func @transform_7(%arg0: i32) -> (i32, i32) {
    %c0_i32 = arith.constant 0 : i32
    %c0_i32_0 = arith.constant 0 : i32
    %c0_i32_1 = arith.constant 0 : i32
    return %c0_i32, %c0_i32_0 : i32, i32
  }
  func.func @transform_8(%arg0: i32) -> (i32, i32) {
    %c0_i32 = arith.constant 0 : i32
    %c0_i32_0 = arith.constant 0 : i32
    return %arg0, %c0_i32 : i32, i32
  }
}

</mosaic_0001>

<llo_original>
// kernel: tpu_custom_call.1
$region0: #{tpu_custom_call.1}
  #allocation0 [shape = 'u32[]', space=smem, size = 0x4, offset = 0x4, fixed_abs, tag = 'smem constant byte address 0x4 - core index']
  #allocation1 [shape = 'u32[72,128]{1,0:T(1,128)}', space=vmem, size = 0x9000, scoped, tag = 'internal scratch']
  %s0 = inlined_call_operand.hbm [shape: f32[1,2], index: 0, kind: input, shape index: {}]
  %s1 = inlined_call_operand.hbm [shape: bf16[8,128], index: 1, kind: input, shape index: {}]
  %s2 = inlined_call_operand.hbm [shape: bf16[128,128], index: 2, kind: input, shape index: {}]
  %s3 = inlined_call_operand.vmem [shape: f32[1,128], index: 3, kind: input, shape index: {}]
  %s4 = inlined_call_operand.hbm [shape: bf16[128,128], index: 4, kind: input, shape index: {}]
  %s5 = inlined_call_operand.vmem [shape: f32[1,128], index: 5, kind: input, shape index: {}]
  %s6 = inlined_call_operand.hbm [shape: bf16[128,128], index: 6, kind: input, shape index: {}]
  %s7 = inlined_call_operand.vmem [shape: f32[1,128], index: 7, kind: input, shape index: {}]
  %s8 = inlined_call_operand.hbm [shape: f32[8,128], index: 8, kind: output, shape index: {}]
  %s9 = sld [smem:[#allocation0]]
  $region62: #{tpu_custom_call.1} parent=0
    _
  %s11 = ssub.s32 1, %s9
  %s12 = scalar_select 0, %s11, %s9
  $region1: #{tpu_custom_call.1} parent=0
    #allocation2 [shape = 'u8[512]{0}', space=smem, size = 0x200, scoped, tag = 'input window, operand 0, single buffered']
    #allocation3 [shape = 's32[1]{0}', space=sflag, size = 0x4, scoped, tag = 'scoped memory for tpu_custom_call.1']
    #allocation4 [shape = 's32[1]{0}', space=sflag, size = 0x4, scoped, tag = 'scoped memory for tpu_custom_call.1']
    #allocation5 [shape = 's32[1]{0}', space=sflag, size = 0x4, scoped, tag = 'scoped memory for tpu_custom_call.1']
    #allocation6 [shape = 'u8[2048]{0}', space=vmem, size = 0x800, scoped, tag = 'input window, operand 1, single buffered']
    #allocation7 [shape = 'u8[32768]{0}', space=vmem, size = 0x8000, scoped, tag = 'input window, operand 2, single buffered']
    #allocation8 [shape = 's32[1]{0}', space=sflag, size = 0x4, scoped, tag = 'scoped memory for tpu_custom_call.1']
    #allocation9 [shape = 'u8[32768]{0}', space=vmem, size = 0x8000, scoped, tag = 'input window, operand 4, single buffered']
    #allocation10 [shape = 'u8[32768]{0}', space=vmem, size = 0x8000, scoped, tag = 'input window, operand 6, single buffered']
    #allocation11 [shape = 's32[1]{0}', space=sflag, size = 0x4, scoped, tag = 'scoped memory for tpu_custom_call.1']
    #allocation12 [shape = 'u8[4096]{0}', space=vmem, size = 0x1000, scoped, tag = 'output window, operand 0, single buffered']
    %13 = vsyncpa [#allocation5], 0
    %14 = vsyncpa [#allocation3], 0
    %15 = vsyncpa [#allocation8], 0
    %16 = vsyncpa [#allocation11], 0
    %17 = vsyncpa [#allocation4], 0
    // Predicated region
    $region2: #{tpu_custom_call.1} parent=1 // pred_check
      _
    $region3: #{tpu_custom_call.1} parent=1 // pred_check_branch
      %19 = sbr.rel (0) target = $region5
    $region4: #{tpu_custom_call.1} parent=1 // pred_region
      %21 = vsyncadd [#allocation5], 0
      %s23 = sshll.u32 %s0, 4
      %s24 = int_to_ptr.hbm [resolvable:$true] %s23
      %26 = dma.hbm_to_smem %s24, 16, [#allocation2], [#allocation5]
    $region5: #{tpu_custom_call.1} parent=1 // pred_fallthru
      _
    // Predicated region
    $region6: #{tpu_custom_call.1} parent=1 // pred_check
      _
    $region7: #{tpu_custom_call.1} parent=1 // pred_check_branch
      %28 = sbr.rel (0) target = $region9
    $region8: #{tpu_custom_call.1} parent=1 // pred_region
      %30 = vsyncadd [#allocation3], 0
      %s32 = sshll.u32 %s1, 4
      %s33 = int_to_ptr.hbm [resolvable:$true] %s32
      %s34 = sshll.u32 [#allocation6], 4
      %s35 = int_to_ptr.vmem [resolvable:$true] %s34
      %37 = dma.hbm_to_vmem [thread:$0]  %s33, 64, %s35, [#allocation3]
    $region9: #{tpu_custom_call.1} parent=1 // pred_fallthru
      _
    // Predicated region
    $region10: #{tpu_custom_call.1} parent=1 // pred_check
      _
    $region11: #{tpu_custom_call.1} parent=1 // pred_check_branch
      %39 = sbr.rel (0) target = $region13
    $region12: #{tpu_custom_call.1} parent=1 // pred_region
      %41 = vsyncadd [#allocation8], 0
      %s42 = sshll.u32 %s2, 4
      %s43 = int_to_ptr.hbm [resolvable:$true] %s42
      %s44 = sshll.u32 [#allocation7], 4
      %s45 = int_to_ptr.vmem [resolvable:$true] %s44
      %50 = dma.hbm_to_vmem [thread:$0]  %s43, 1024, %s45, [#allocation8], 64, 64, 4
    $region13: #{tpu_custom_call.1} parent=1 // pred_fallthru
      _
    // Predicated region
    $region14: #{tpu_custom_call.1} parent=1 // pred_check
      _
    $region15: #{tpu_custom_call.1} parent=1 // pred_check_branch
      %52 = sbr.rel (0) target = $region17
    $region16: #{tpu_custom_call.1} parent=1 // pred_region
      _
    $region17: #{tpu_custom_call.1} parent=1 // pred_fallthru
      _
    // Predicated region
    $region18: #{tpu_custom_call.1} parent=1 // pred_check
      _
    $region19: #{tpu_custom_call.1} parent=1 // pred_check_branch
      %54 = sbr.rel (0) target = $region21
    $region20: #{tpu_custom_call.1} parent=1 // pred_region
      %56 = vsyncadd [#allocation8], 0
      %s57 = sshll.u32 %s4, 4
      %s58 = int_to_ptr.hbm [resolvable:$true] %s57
      %s59 = sshll.u32 [#allocation9], 4
      %s60 = int_to_ptr.vmem [resolvable:$true] %s59
      %65 = dma.hbm_to_vmem [thread:$0]  %s58, 1024, %s60, [#allocation8], 64, 64, 4
    $region21: #{tpu_custom_call.1} parent=1 // pred_fallthru
      _
    // Predicated region
    $region22: #{tpu_custom_call.1} parent=1 // pred_check
      _
    $region23: #{tpu_custom_call.1} parent=1 // pred_check_branch
      %67 = sbr.rel (0) target = $region25
    $region24: #{tpu_custom_call.1} parent=1 // pred_region
      _
    $region25: #{tpu_custom_call.1} parent=1 // pred_fallthru
      _
    // Predicated region
    $region26: #{tpu_custom_call.1} parent=1 // pred_check
      _
    $region27: #{tpu_custom_call.1} parent=1 // pred_check_branch
      %69 = sbr.rel (0) target = $region29
    $region28: #{tpu_custom_call.1} parent=1 // pred_region
      %71 = vsyncadd [#allocation11], 0
      %s72 = sshll.u32 %s6, 4
      %s73 = int_to_ptr.hbm [resolvable:$true] %s72
      %s74 = sshll.u32 [#allocation10], 4
      %s75 = int_to_ptr.vmem [resolvable:$true] %s74
      %80 = dma.hbm_to_vmem [thread:$0]  %s73, 1024, %s75, [#allocation11], 64, 64, 4
    $region29: #{tpu_custom_call.1} parent=1 // pred_fallthru
      _
    // Predicated region
    $region30: #{tpu_custom_call.1} parent=1 // pred_check
      _
    $region31: #{tpu_custom_call.1} parent=1 // pred_check_branch
      %82 = sbr.rel (0) target = $region33
    $region32: #{tpu_custom_call.1} parent=1 // pred_region
      _
    $region33: #{tpu_custom_call.1} parent=1 // pred_fallthru
      _
    // Predicated region
    $region34: #{tpu_custom_call.1} parent=1 // pred_check
      _
    $region35: #{tpu_custom_call.1} parent=1 // pred_check_branch
      %84 = sbr.rel (0) target = $region37
    $region36: #{tpu_custom_call.1} parent=1 // pred_region
      %86 = dma.done [#allocation5], 16
    $region37: #{tpu_custom_call.1} parent=1 // pred_fallthru
      _
    // Predicated region
    $region38: #{tpu_custom_call.1} parent=1 // pred_check
      _
    $region39: #{tpu_custom_call.1} parent=1 // pred_check_branch
      %88 = sbr.rel (0) target = $region41
    $region40: #{tpu_custom_call.1} parent=1 // pred_region
      %90 = dma.done [#allocation3], 64
    $region41: #{tpu_custom_call.1} parent=1 // pred_fallthru
      _
    // Predicated region
    $region42: #{tpu_custom_call.1} parent=1 // pred_check
      _
    $region43: #{tpu_custom_call.1} parent=1 // pred_check_branch
      %92 = sbr.rel (0) target = $region45
    $region44: #{tpu_custom_call.1} parent=1 // pred_region
      %94 = dma.done [#allocation8], 1024
    $region45: #{tpu_custom_call.1} parent=1 // pred_fallthru
      _
    // Predicated region
    $region46: #{tpu_custom_call.1} parent=1 // pred_check
      _
    $region47: #{tpu_custom_call.1} parent=1 // pred_check_branch
      %96 = sbr.rel (0) target = $region49
    $region48: #{tpu_custom_call.1} parent=1 // pred_region
      %98 = dma.done [#allocation8], 1024
    $region49: #{tpu_custom_call.1} parent=1 // pred_fallthru
      _
    // Predicated region
    $region50: #{tpu_custom_call.1} parent=1 // pred_check
      _
    $region51: #{tpu_custom_call.1} parent=1 // pred_check_branch
      %100 = sbr.rel (0) target = $region53
    $region52: #{tpu_custom_call.1} parent=1 // pred_region
      %102 = dma.done [#allocation11], 1024
    $region53: #{tpu_custom_call.1} parent=1 // pred_fallthru
      _
    %103 = sfence
    %v104 = vld [vmem:[#allocation6] sm:$0xf]
    %v105 = vld [vmem:[#allocation7] sm:$0xf]
    %v106 = vld [vmem:[#allocation7 + $0x4] sm:$0xf]
    %v107 = vld [vmem:[#allocation7 + $0x8] sm:$0xf]
    %v108 = vld [vmem:[#allocation7 + $0xc] sm:$0xf]
    %v109 = vld [vmem:[#allocation7 + $0x10] sm:$0xf]
    %v110 = vld [vmem:[#allocation7 + $0x14] sm:$0xf]
    %v111 = vld [vmem:[#allocation7 + $0x18] sm:$0xf]
    %v112 = vld [vmem:[#allocation7 + $0x1c] sm:$0xf]
    %v113 = vld [vmem:[#allocation7 + $0x20] sm:$0xf]
    %v114 = vld [vmem:[#allocation7 + $0x24] sm:$0xf]
    %v115 = vld [vmem:[#allocation7 + $0x28] sm:$0xf]
    %v116 = vld [vmem:[#allocation7 + $0x2c] sm:$0xf]
    %v117 = vld [vmem:[#allocation7 + $0x30] sm:$0xf]
    %v118 = vld [vmem:[#allocation7 + $0x34] sm:$0xf]
    %v119 = vld [vmem:[#allocation7 + $0x38] sm:$0xf]
    %v120 = vld [vmem:[#allocation7 + $0x3c] sm:$0xf]
    %v121 = vld [vmem:[%s3] sm:$0x1]
    %v123 = vperm.slane %v121, 0
    %v141 = vunpack.c.l.b16 %v105
    %v142 = vunpack.c.l.b16 %v106
    %v143 = vunpack.c.l.b16 %v107
    %v144 = vunpack.c.l.b16 %v108
    %v145 = vunpack.c.l.b16 %v109
    %v146 = vunpack.c.l.b16 %v110
    %v147 = vunpack.c.l.b16 %v111
    %v148 = vunpack.c.l.b16 %v112
    %v149 = vunpack.c.l.b16 %v113
    %v150 = vunpack.c.l.b16 %v114
    %v151 = vunpack.c.l.b16 %v115
    %v152 = vunpack.c.l.b16 %v116
    %v153 = vunpack.c.l.b16 %v117
    %v154 = vunpack.c.l.b16 %v118
    %v155 = vunpack.c.l.b16 %v119
    %v156 = vunpack.c.l.b16 %v120
    %v157 = vpack.c.b16 %v142, %v141
    %v158 = vpack.c.b16 %v144, %v143
    %v159 = vpack.c.b16 %v146, %v145
    %v160 = vpack.c.b16 %v148, %v147
    %v161 = vpack.c.b16 %v150, %v149
    %v162 = vpack.c.b16 %v152, %v151
    %v163 = vpack.c.b16 %v154, %v153
    %v164 = vpack.c.b16 %v156, %v155
    %173 = vmatpush.bf16.msra.mxu0 %v164
    %174 = vmatpush.bf16.msra.mxu0 %v163
    %175 = vmatpush.bf16.msra.mxu0 %v162
    %176 = vmatpush.bf16.msra.mxu0 %v161
    %177 = vmatpush.bf16.msra.mxu0 %v160
    %178 = vmatpush.bf16.msra.mxu0 %v159
    %179 = vmatpush.bf16.msra.mxu0 %v158
    %180 = vmatpush.bf16.msra.mxu0 %v157
    %181 = vmatmul.bf16.gmra.mxu0 %v104
    %v182 = vpop.f32.mrf.mxu0
    %v183 = vadd.f32 %v123, %v182
    %v184 = vpop.f32.mrf.mxu0
    %185 = vdwg.mxu0
    %s186 = sld [smem:[#allocation2]]
    %vm187 = vcmp.ge.f32.partialorder %v183, 0.0
    %v188 = vstv %s186
    %v189 = vmul.f32 %v188, %v183
    %v190 = vsel %vm187, %v183, %v189
    %v191 = vpack.c.bf16 %v190, %v190
    %v192 = vld [vmem:[#allocation9] sm:$0xf]
    %v193 = vld [vmem:[#allocation9 + $0x4] sm:$0xf]
    %v194 = vld [vmem:[#allocation9 + $0x8] sm:$0xf]
    %v195 = vld [vmem:[#allocation9 + $0xc] sm:$0xf]
    %v196 = vld [vmem:[#allocation9 + $0x10] sm:$0xf]
    %v197 = vld [vmem:[#allocation9 + $0x14] sm:$0xf]
    %v198 = vld [vmem:[#allocation9 + $0x18] sm:$0xf]
    %v199 = vld [vmem:[#allocation9 + $0x1c] sm:$0xf]
    %v200 = vld [vmem:[#allocation9 + $0x20] sm:$0xf]
    %v201 = vld [vmem:[#allocation9 + $0x24] sm:$0xf]
    %v202 = vld [vmem:[#allocation9 + $0x28] sm:$0xf]
    %v203 = vld [vmem:[#allocation9 + $0x2c] sm:$0xf]
    %v204 = vld [vmem:[#allocation9 + $0x30] sm:$0xf]
    %v205 = vld [vmem:[#allocation9 + $0x34] sm:$0xf]
    %v206 = vld [vmem:[#allocation9 + $0x38] sm:$0xf]
    %v207 = vld [vmem:[#allocation9 + $0x3c] sm:$0xf]
    %v208 = vld [vmem:[%s5] sm:$0x1]
    %v210 = vperm.slane %v208, 0
    %v228 = vunpack.c.l.b16 %v192
    %v229 = vunpack.c.l.b16 %v193
    %v230 = vunpack.c.l.b16 %v194
    %v231 = vunpack.c.l.b16 %v195
    %v232 = vunpack.c.l.b16 %v196
    %v233 = vunpack.c.l.b16 %v197
    %v234 = vunpack.c.l.b16 %v198
    %v235 = vunpack.c.l.b16 %v199
    %v236 = vunpack.c.l.b16 %v200
    %v237 = vunpack.c.l.b16 %v201
    %v238 = vunpack.c.l.b16 %v202
    %v239 = vunpack.c.l.b16 %v203
    %v240 = vunpack.c.l.b16 %v204
    %v241 = vunpack.c.l.b16 %v205
    %v242 = vunpack.c.l.b16 %v206
    %v243 = vunpack.c.l.b16 %v207
    %v244 = vpack.c.b16 %v229, %v228
    %v245 = vpack.c.b16 %v231, %v230
    %v246 = vpack.c.b16 %v233, %v232
    %v247 = vpack.c.b16 %v235, %v234
    %v248 = vpack.c.b16 %v237, %v236
    %v249 = vpack.c.b16 %v239, %v238
    %v250 = vpack.c.b16 %v241, %v240
    %v251 = vpack.c.b16 %v243, %v242
    %260 = vmatpush.bf16.msra.mxu0 %v251
    %261 = vmatpush.bf16.msra.mxu0 %v250
    %262 = vmatpush.bf16.msra.mxu0 %v249
    %263 = vmatpush.bf16.msra.mxu0 %v248
    %264 = vmatpush.bf16.msra.mxu0 %v247
    %265 = vmatpush.bf16.msra.mxu0 %v246
    %266 = vmatpush.bf16.msra.mxu0 %v245
    %267 = vmatpush.bf16.msra.mxu0 %v244
    %268 = vmatmul.bf16.gmra.mxu0 %v191
    %v269 = vpop.f32.mrf.mxu0
    %v270 = vadd.f32 %v210, %v269
    %v271 = vpop.f32.mrf.mxu0
    %272 = vdwg.mxu0
    %s273 = sld [smem:[#allocation2 + $0x1]]
    %vm274 = vcmp.ge.f32.partialorder %v270, 0.0
    %v275 = vstv %s273
    %v276 = vmul.f32 %v275, %v270
    %v277 = vsel %vm274, %v270, %v276
    %v278 = vpack.c.bf16 %v277, %v277
    %v279 = vld [vmem:[#allocation10] sm:$0xf]
    %v280 = vld [vmem:[#allocation10 + $0x4] sm:$0xf]
    %v281 = vld [vmem:[#allocation10 + $0x8] sm:$0xf]
    %v282 = vld [vmem:[#allocation10 + $0xc] sm:$0xf]
    %v283 = vld [vmem:[#allocation10 + $0x10] sm:$0xf]
    %v284 = vld [vmem:[#allocation10 + $0x14] sm:$0xf]
    %v285 = vld [vmem:[#allocation10 + $0x18] sm:$0xf]
    %v286 = vld [vmem:[#allocation10 + $0x1c] sm:$0xf]
    %v287 = vld [vmem:[#allocation10 + $0x20] sm:$0xf]
    %v288 = vld [vmem:[#allocation10 + $0x24] sm:$0xf]
    %v289 = vld [vmem:[#allocation10 + $0x28] sm:$0xf]
    %v290 = vld [vmem:[#allocation10 + $0x2c] sm:$0xf]
    %v291 = vld [vmem:[#allocation10 + $0x30] sm:$0xf]
    %v292 = vld [vmem:[#allocation10 + $0x34] sm:$0xf]
    %v293 = vld [vmem:[#allocation10 + $0x38] sm:$0xf]
    %v294 = vld [vmem:[#allocation10 + $0x3c] sm:$0xf]
    %v295 = vld [vmem:[%s7] sm:$0x1]
    %v297 = vperm.slane %v295, 0
    %v315 = vunpack.c.l.b16 %v279
    %v316 = vunpack.c.l.b16 %v280
    %v317 = vunpack.c.l.b16 %v281
    %v318 = vunpack.c.l.b16 %v282
    %v319 = vunpack.c.l.b16 %v283
    %v320 = vunpack.c.l.b16 %v284
    %v321 = vunpack.c.l.b16 %v285
    %v322 = vunpack.c.l.b16 %v286
    %v323 = vunpack.c.l.b16 %v287
    %v324 = vunpack.c.l.b16 %v288
    %v325 = vunpack.c.l.b16 %v289
    %v326 = vunpack.c.l.b16 %v290
    %v327 = vunpack.c.l.b16 %v291
    %v328 = vunpack.c.l.b16 %v292
    %v329 = vunpack.c.l.b16 %v293
    %v330 = vunpack.c.l.b16 %v294
    %v331 = vpack.c.b16 %v316, %v315
    %v332 = vpack.c.b16 %v318, %v317
    %v333 = vpack.c.b16 %v320, %v319
    %v334 = vpack.c.b16 %v322, %v321
    %v335 = vpack.c.b16 %v324, %v323
    %v336 = vpack.c.b16 %v326, %v325
    %v337 = vpack.c.b16 %v328, %v327
    %v338 = vpack.c.b16 %v330, %v329
    %347 = vmatpush.bf16.msra.mxu0 %v338
    %348 = vmatpush.bf16.msra.mxu0 %v337
    %349 = vmatpush.bf16.msra.mxu0 %v336
    %350 = vmatpush.bf16.msra.mxu0 %v335
    %351 = vmatpush.bf16.msra.mxu0 %v334
    %352 = vmatpush.bf16.msra.mxu0 %v333
    %353 = vmatpush.bf16.msra.mxu0 %v332
    %354 = vmatpush.bf16.msra.mxu0 %v331
    %355 = vmatmul.bf16.gmra.mxu0 %v278
    %v356 = vpop.f32.mrf.mxu0
    %v357 = vadd.f32 %v297, %v356
    %v358 = vpop.f32.mrf.mxu0
    %359 = vdwg.mxu0
    %360 = vst [vmem:[#allocation12] sm:$0xff] %v357
    // Predicated region
    $region54: #{tpu_custom_call.1} parent=1 // pred_check
      _
    $region55: #{tpu_custom_call.1} parent=1 // pred_check_branch
      %362 = sbr.rel (0) target = $region57
    $region56: #{tpu_custom_call.1} parent=1 // pred_region
      %364 = vsyncadd [#allocation4], 0
      %s366 = sshll.u32 [#allocation12], 4
      %s367 = int_to_ptr.vmem [resolvable:$true] %s366
      %s368 = sshll.u32 %s8, 4
      %s369 = int_to_ptr.hbm [resolvable:$true] %s368
      %371 = dma.vmem_to_hbm [thread:$0]  %s367, 128, %s369, [#allocation4]
    $region57: #{tpu_custom_call.1} parent=1 // pred_fallthru
      _
    // Predicated region
    $region58: #{tpu_custom_call.1} parent=1 // pred_check
      _
    $region59: #{tpu_custom_call.1} parent=1 // pred_check_branch
      %373 = sbr.rel (0) target = $region61
    $region60: #{tpu_custom_call.1} parent=1 // pred_region
      %375 = dma.done [#allocation4], 128
    $region61: #{tpu_custom_call.1} parent=1 // pred_fallthru
      _
    %376 = vsyncpa [#allocation3], 1
    %377 = vsyncpa [#allocation8], 1
    %378 = vsyncpa [#allocation11], 1
    %379 = vsyncpa [#allocation4], 1
    %380 = vsyncpa [#allocation5], 1

</llo_original>
